<compile_context>
chip_gen: v7x
topology: tpu7x:2x2x1
jax: 0.10.0
libtpu: 0.0.40
codegen_flags: <defaults>
</compile_context>

<pallas_src>
import jax
import jax.numpy as jnp
from jax import lax
from jax.experimental import pallas as pl
from jax.experimental.pallas import tpu as pltpu

BN_EPS = 1e-5          # PyTorch BatchNorm2d default eps
NEG_FILL = -1.0e9      # masked_fill value
_PC = 8                # padded conv1 output-channel count (one sublane group)
_VLANES = 128          # lane width of the per-state value output row


def _a2c_kernel(x_ref, p_ref, s_ref, probs_ref, value_ref):
    """One grid step = one environment state (torch B==1 semantics).

    x_ref     : VMEM (1, 3, N) f32  raw state rows [stock, bias_mask, mask]
    p_ref     : VMEM (56, N) f32    lane-pre-broadcast per-channel params:
                rows [0:8)=w1*stock  [8:16)=w1*bias_mask  [16:24)=w1*mask
                     [24:32)=b1  [32:40)=gamma1  [40:48)=beta1  [48:56)=w2
    s_ref     : SMEM (5,) f32       [b2, gamma2, beta2, actor_w, actor_b]
    probs_ref : VMEM (1, 1, N) f32  softmax probabilities for this state
    value_ref : VMEM (1, 1, 128) f32 value broadcast across lanes (col 0 used)
    """
    x = x_ref[0]                                     # (3, N)
    n = x.shape[-1]
    inv_n = 1.0 / float(n)

    b2 = s_ref[0]
    gamma2 = s_ref[1]
    beta2 = s_ref[2]
    wa = s_ref[3]
    ba = s_ref[4]

    # ---- conv1 (1x1, 3->F) on all 8 zero-padded channels at once.
    # Weights/bias already lane-broadcast; only the state rows broadcast
    # across sublanes.  (MXU intentionally not used: fill/drain latency of a
    # tiny 8x3xN matmul exceeds these few VPU FMAs.)
    acc = (p_ref[0:8, :] * x[0:1, :]
           + p_ref[8:16, :] * x[1:2, :]
           + p_ref[16:24, :] * x[2:3, :]
           + p_ref[24:32, :])                                       # (8, N)

    # ---- bn1 (training-mode batch stats), single-pass variance ----
    s1 = jnp.sum(acc, axis=-1, keepdims=True) * inv_n               # E[x]  (8,1)
    q1 = jnp.sum(acc * acc, axis=-1, keepdims=True) * inv_n         # E[x^2](8,1)
    var1 = q1 - s1 * s1
    h = (acc - s1) * lax.rsqrt(var1 + BN_EPS) * p_ref[32:40, :] + p_ref[40:48, :]

    # ---- conv2 (1x1, F->1): weighted sublane reduction (padded rows are 0) ----
    f = jnp.sum(h * p_ref[48:56, :], axis=0, keepdims=True) + b2    # (1, N)

    # ---- bn2 (single channel), single-pass variance ----
    s2 = jnp.sum(f, axis=-1, keepdims=True) * inv_n
    q2 = jnp.sum(f * f, axis=-1, keepdims=True) * inv_n
    var2 = q2 - s2 * s2
    f = (f - s2) * lax.rsqrt(var2 + BN_EPS) * gamma2 + beta2        # (1, N)

    # ---- actor (1x1 conv, 1->1) + masked_fill ----
    a = wa * f + ba
    logits = jnp.where(x[2:3, :] == 0.0, NEG_FILL, a)               # mask row

    # ---- value = max(f) and softmax row-max: independent, dual-issue XLU ----
    vmax = jnp.max(f, axis=-1, keepdims=True)                       # (1, 1)
    row_max = jnp.max(logits, axis=-1, keepdims=True)               # (1, 1)
    value_ref[0] = jnp.broadcast_to(vmax, (1, _VLANES))             # full-lane store

    # ---- softmax over the flattened map (exact normalization) ----
    e = jnp.exp(logits - row_max)
    denom = jnp.sum(e, axis=-1, keepdims=True)
    probs_ref[0] = e * pl.reciprocal(denom, approx=False)


def pack_params(params, hw):
    """Build the constant kernel operands (hoist: compute once per model).

    Returns:
      slab    : (56, hw) f32  per-channel params pre-broadcast along lanes,
                zero-padded to 8 channels.  conv1 weight columns are reordered
                to the RAW state channel order [stock, bias_mask, mask]
                (FilterCNN concatenates [stock, mask, bias_mask], so torch
                columns are taken [0, 2, 1]).
      scalars : (5,) f32  [b2, gamma2, beta2, actor_w, actor_b]  (SMEM operand)
    """
    F = int(params["w1"].shape[0])
    assert F <= _PC
    w1 = jnp.asarray(params["w1"], jnp.float32)                 # (F, 3) torch order
    w1_raw = w1[:, jnp.array([0, 2, 1])]                        # raw state order
    cols = jnp.stack([
        w1_raw[:, 0], w1_raw[:, 1], w1_raw[:, 2],
        jnp.asarray(params["b1"], jnp.float32),
        jnp.asarray(params["gamma1"], jnp.float32),
        jnp.asarray(params["beta1"], jnp.float32),
        jnp.asarray(params["w2"], jnp.float32).reshape(F),
    ], axis=0)                                                  # (7, F)
    cols = jnp.pad(cols, ((0, 0), (0, _PC - F)))                # (7, 8)
    slab = jnp.broadcast_to(cols[:, :, None], (7, _PC, hw)).reshape(7 * _PC, hw)
    slab = jnp.asarray(slab, jnp.float32)
    scalars = jnp.stack([jnp.asarray(params[k], jnp.float32).reshape(())
                         for k in ("b2", "gamma2", "beta2", "wa", "ba")])
    return slab, scalars


def a2c_actor_critic_forward(states, param_slab, param_scalars):
    """states: [B, 3, H, W] f32 — a batch of INDEPENDENT environment states.

    Each grid step reproduces the module's single-state (B==1) forward:
    per-state BatchNorm training statistics, per-state masked softmax, and
    per-state value = max(f).  Returns (probs [B, H*W], values [B]).
    H*W should be a multiple of 128 for fully lane-dense stores (true at 16x16).
    """
    B, C, H, W = states.shape
    assert C == 3, "state must have 3 channels: stock, bias_mask, mask"
    HW = H * W
    # Contiguous-dim collapse only (no data movement): lane-dense (3, HW) rows.
    x = states.reshape(B, 3, HW).astype(jnp.float32)

    cost = pl.CostEstimate(
        flops=160 * B * HW,
        transcendentals=B * (HW + 16),
        bytes_accessed=4 * (B * 3 * HW + 7 * _PC * HW + 5 + B * HW + B * _VLANES),
    )

    probs3, vals3 = pl.pallas_call(
        _a2c_kernel,
        grid=(B,),
        in_specs=[
            pl.BlockSpec((1, 3, HW), lambda b: (b, 0, 0)),          # per-state block
            pl.BlockSpec((7 * _PC, HW), lambda b: (0, 0)),          # VMEM-resident
            pl.BlockSpec(memory_space=pltpu.MemorySpace.SMEM),      # 5 scalars
        ],
        out_specs=(
            pl.BlockSpec((1, 1, HW), lambda b: (b, 0, 0)),
            pl.BlockSpec((1, 1, _VLANES), lambda b: (b, 0, 0)),
        ),
        out_shape=(jax.ShapeDtypeStruct((B, 1, HW), jnp.float32),
                   jax.ShapeDtypeStruct((B, 1, _VLANES), jnp.float32)),
        compiler_params=pltpu.CompilerParams(dimension_semantics=("parallel",)),
        cost_estimate=cost,
    )(x, param_slab, param_scalars)

    return probs3.reshape(B, HW), vals3[:, 0, 0]


def init_params(key, filter_out=3):
    """Deterministic parameter init (shapes mirror the PyTorch module)."""
    k1, k2, k3, k4, k5, k6 = jax.random.split(key, 6)
    return {
        # FilterCNN.conv1: Conv2d(3, F, 1) -> weight [F, 3], bias [F]
        "w1": 0.3 * jax.random.normal(k1, (filter_out, 3), jnp.float32),
        "b1": 0.1 * jax.random.normal(k2, (filter_out,), jnp.float32),
        # FilterCNN.bn1: LazyBatchNorm2d(F) fresh init
        "gamma1": jnp.ones((filter_out,), jnp.float32),
        "beta1": jnp.zeros((filter_out,), jnp.float32),
        # FilterCNN.conv2: Conv2d(F, 1, 1) -> weight [F], bias scalar
        "w2": 0.3 * jax.random.normal(k3, (filter_out,), jnp.float32),
        "b2": 0.1 * jax.random.normal(k4, (), jnp.float32),
        # FilterCNN.bn2: LazyBatchNorm2d(1) fresh init
        "gamma2": jnp.float32(1.0),
        "beta2": jnp.float32(0.0),
        # actor: Conv2d(1, 1, 1) -> scalar weight + bias
        "wa": 0.3 * jax.random.normal(k5, (), jnp.float32),
        "ba": 0.1 * jax.random.normal(k6, (), jnp.float32),
    }


def _reference_forward(states, params):
    """Pure-JAX replica of the torch module (per-state B==1 semantics)."""
    B, _, H, W = states.shape
    stock, bias_mask, mask = states[:, 0], states[:, 1], states[:, 2]
    x = jnp.stack([stock, mask, bias_mask], axis=1)            # torch concat order
    y = jnp.einsum("fc,bchw->bfhw", params["w1"], x) + params["b1"][None, :, None, None]
    mu = y.mean(axis=(2, 3), keepdims=True)
    var = y.var(axis=(2, 3), keepdims=True)                    # biased, per state
    y = (y - mu) / jnp.sqrt(var + BN_EPS)
    y = y * params["gamma1"][None, :, None, None] + params["beta1"][None, :, None, None]
    f = jnp.einsum("f,bfhw->bhw", params["w2"], y)[:, None] + params["b2"]
    mu2 = f.mean(axis=(2, 3), keepdims=True)
    var2 = f.var(axis=(2, 3), keepdims=True)
    f = (f - mu2) / jnp.sqrt(var2 + BN_EPS) * params["gamma2"] + params["beta2"]
    a = params["wa"] * f + params["ba"]
    logits = jnp.where(mask[:, None] == 0, NEG_FILL, a).reshape(B, H * W)
    probs = jax.nn.softmax(logits, axis=-1)
    values = f.reshape(B, -1).max(axis=-1)
    return probs, values


if __name__ == "__main__":
    key = jax.random.PRNGKey(0)
    kp, ks, km, kb = jax.random.split(key, 4)

    B, H, W = 8, 16, 16          # batch of independent environment states
    filter_out = 3

    params = init_params(kp, filter_out)
    param_slab, param_scalars = pack_params(params, H * W)   # constant per model

    stock = jax.random.normal(ks, (B, H, W), jnp.float32)
    mask = (jax.random.uniform(km, (B, H, W)) > 0.3).astype(jnp.float32)
    bias_mask = (jax.random.uniform(kb, (B, H, W)) > 0.5).astype(jnp.float32)
    # state channel order matches the PyTorch module: [stock, bias_mask, mask]
    states = jnp.stack([stock, bias_mask, mask], axis=1)      # [B, 3, H, W]

    fwd = jax.jit(a2c_actor_critic_forward)
    probs, values = fwd(states, param_slab, param_scalars)
    jax.block_until_ready((probs, values))

    # correctness checks vs. pure-JAX reference
    p_ref, v_ref = _reference_forward(states, params)
    assert probs.shape == (B, H * W) and values.shape == (B,)
    assert float(jnp.max(jnp.abs(jnp.sum(probs, axis=-1) - 1.0))) < 2e-3
    assert float(jnp.max(jnp.abs(probs - p_ref))) < 2e-3
    assert float(jnp.max(jnp.abs(values - v_ref))) < 2e-3
    assert bool(jnp.all(jnp.isfinite(values)))
    # TODO(synk): Categorical distribution object / Adam optimizer / checkpoint
    # I/O are framework-side; the kernel returns the distribution's
    # probabilities and the per-state value scalar.
    print("KERNEL_OK")
</pallas_src>

<mosaic_0001>
module attributes {stable_mosaic.version = 11 : i64} {
  func.func @_a2c_kernel(%arg0: i32, %arg1: memref<1x3x256xf32, #tpu.memory_space<vmem>>, %arg2: memref<56x256xf32, #tpu.memory_space<vmem>>, %arg3: memref<5xf32, #tpu.memory_space<smem>>, %arg4: memref<1x1x256xf32, #tpu.memory_space<vmem>>, %arg5: memref<1x1x128xf32, #tpu.memory_space<vmem>>) attributes {dimension_semantics = [#tpu.dimension_semantics<parallel>], iteration_bounds = array<i64: 8>, scalar_prefetch = 0 : i64, scratch_operands = 0 : i64, tpu.core_type = #tpu.core_type<tc>, window_params = [{transform_indices = @transform_0, window_bounds = array<i64: 1, 3, 256>}, {pipeline_mode = #tpu.pipeline_mode<synchronous>, transform_indices = @transform_1, window_bounds = array<i64: 56, 256>}, {transform_indices = @transform_2, window_bounds = array<i64: 5>}, {transform_indices = @transform_3, window_bounds = array<i64: 1, 1, 256>}, {transform_indices = @transform_4, window_bounds = array<i64: 1, 1, 128>}]} {
    %c0 = arith.constant 0 : index
    %c0_0 = arith.constant 0 : index
    %c0_1 = arith.constant 0 : index
    %0 = vector.load %arg1[%c0, %c0_0, %c0_1] : memref<1x3x256xf32, #tpu.memory_space<vmem>>, vector<1x3x256xf32>
    %1 = vector.shape_cast %0 : vector<1x3x256xf32> to vector<3x256xf32>
    %c0_2 = arith.constant 0 : index
    %2 = memref.load %arg3[%c0_2] : memref<5xf32, #tpu.memory_space<smem>>
    %c1 = arith.constant 1 : index
    %3 = memref.load %arg3[%c1] : memref<5xf32, #tpu.memory_space<smem>>
    %c2 = arith.constant 2 : index
    %4 = memref.load %arg3[%c2] : memref<5xf32, #tpu.memory_space<smem>>
    %c3 = arith.constant 3 : index
    %5 = memref.load %arg3[%c3] : memref<5xf32, #tpu.memory_space<smem>>
    %c4 = arith.constant 4 : index
    %6 = memref.load %arg3[%c4] : memref<5xf32, #tpu.memory_space<smem>>
    %c0_3 = arith.constant 0 : index
    %c0_4 = arith.constant 0 : index
    %7 = vector.load %arg2[%c0_3, %c0_4] : memref<56x256xf32, #tpu.memory_space<vmem>>, vector<8x256xf32>
    %8 = vector.extract_strided_slice %1 {offsets = [0, 0], sizes = [1, 256], strides = [1, 1]} : vector<3x256xf32> to vector<1x256xf32>
    %9 = vector.broadcast %8 : vector<1x256xf32> to vector<8x256xf32>
    %10 = arith.mulf %7, %9 : vector<8x256xf32>
    %c8 = arith.constant 8 : index
    %c0_5 = arith.constant 0 : index
    %11 = vector.load %arg2[%c8, %c0_5] : memref<56x256xf32, #tpu.memory_space<vmem>>, vector<8x256xf32>
    %12 = vector.extract_strided_slice %1 {offsets = [1, 0], sizes = [1, 256], strides = [1, 1]} : vector<3x256xf32> to vector<1x256xf32>
    %13 = vector.broadcast %12 : vector<1x256xf32> to vector<8x256xf32>
    %14 = arith.mulf %11, %13 : vector<8x256xf32>
    %15 = arith.addf %10, %14 : vector<8x256xf32>
    %c16 = arith.constant 16 : index
    %c0_6 = arith.constant 0 : index
    %16 = vector.load %arg2[%c16, %c0_6] : memref<56x256xf32, #tpu.memory_space<vmem>>, vector<8x256xf32>
    %17 = vector.extract_strided_slice %1 {offsets = [2, 0], sizes = [1, 256], strides = [1, 1]} : vector<3x256xf32> to vector<1x256xf32>
    %18 = vector.broadcast %17 : vector<1x256xf32> to vector<8x256xf32>
    %19 = arith.mulf %16, %18 : vector<8x256xf32>
    %20 = arith.addf %15, %19 : vector<8x256xf32>
    %c24 = arith.constant 24 : index
    %c0_7 = arith.constant 0 : index
    %21 = vector.load %arg2[%c24, %c0_7] : memref<56x256xf32, #tpu.memory_space<vmem>>, vector<8x256xf32>
    %22 = arith.addf %20, %21 : vector<8x256xf32>
    %cst = arith.constant dense<0.000000e+00> : vector<8xf32>
    %23 = vector.multi_reduction <add>, %22, %cst [1] : vector<8x256xf32> to vector<8xf32>
    %24 = vector.shape_cast %23 : vector<8xf32> to vector<8x1xf32>
    %cst_8 = arith.constant 3.906250e-03 : f32
    %25 = vector.broadcast %cst_8 : f32 to vector<8x1xf32>
    %26 = arith.mulf %24, %25 : vector<8x1xf32>
    %27 = arith.mulf %22, %22 : vector<8x256xf32>
    %cst_9 = arith.constant dense<0.000000e+00> : vector<8xf32>
    %28 = vector.multi_reduction <add>, %27, %cst_9 [1] : vector<8x256xf32> to vector<8xf32>
    %29 = vector.shape_cast %28 : vector<8xf32> to vector<8x1xf32>
    %cst_10 = arith.constant 3.906250e-03 : f32
    %30 = vector.broadcast %cst_10 : f32 to vector<8x1xf32>
    %31 = arith.mulf %29, %30 : vector<8x1xf32>
    %32 = arith.mulf %26, %26 : vector<8x1xf32>
    %33 = arith.subf %31, %32 : vector<8x1xf32>
    %34 = vector.broadcast %26 : vector<8x1xf32> to vector<8x256xf32>
    %35 = arith.subf %22, %34 : vector<8x256xf32>
    %cst_11 = arith.constant 9.99999974E-6 : f32
    %36 = vector.broadcast %cst_11 : f32 to vector<8x1xf32>
    %37 = arith.addf %33, %36 : vector<8x1xf32>
    %38 = math.rsqrt %37 : vector<8x1xf32>
    %39 = vector.broadcast %38 : vector<8x1xf32> to vector<8x256xf32>
    %40 = arith.mulf %35, %39 : vector<8x256xf32>
    %c32 = arith.constant 32 : index
    %c0_12 = arith.constant 0 : index
    %41 = vector.load %arg2[%c32, %c0_12] : memref<56x256xf32, #tpu.memory_space<vmem>>, vector<8x256xf32>
    %42 = arith.mulf %40, %41 : vector<8x256xf32>
    %c40 = arith.constant 40 : index
    %c0_13 = arith.constant 0 : index
    %43 = vector.load %arg2[%c40, %c0_13] : memref<56x256xf32, #tpu.memory_space<vmem>>, vector<8x256xf32>
    %44 = arith.addf %42, %43 : vector<8x256xf32>
    %c48 = arith.constant 48 : index
    %c0_14 = arith.constant 0 : index
    %45 = vector.load %arg2[%c48, %c0_14] : memref<56x256xf32, #tpu.memory_space<vmem>>, vector<8x256xf32>
    %46 = arith.mulf %44, %45 : vector<8x256xf32>
    %cst_15 = arith.constant dense<0.000000e+00> : vector<256xf32>
    %47 = vector.multi_reduction <add>, %46, %cst_15 [0] : vector<8x256xf32> to vector<256xf32>
    %48 = vector.shape_cast %47 : vector<256xf32> to vector<1x256xf32>
    %49 = vector.broadcast %2 : f32 to vector<1x256xf32>
    %50 = arith.addf %48, %49 : vector<1x256xf32>
    %cst_16 = arith.constant dense<0.000000e+00> : vector<1xf32>
    %51 = vector.multi_reduction <add>, %50, %cst_16 [1] : vector<1x256xf32> to vector<1xf32>
    %52 = vector.shape_cast %51 : vector<1xf32> to vector<1x1xf32>
    %cst_17 = arith.constant 3.906250e-03 : f32
    %53 = vector.broadcast %cst_17 : f32 to vector<1x1xf32>
    %54 = arith.mulf %52, %53 : vector<1x1xf32>
    %55 = arith.mulf %50, %50 : vector<1x256xf32>
    %cst_18 = arith.constant dense<0.000000e+00> : vector<1xf32>
    %56 = vector.multi_reduction <add>, %55, %cst_18 [1] : vector<1x256xf32> to vector<1xf32>
    %57 = vector.shape_cast %56 : vector<1xf32> to vector<1x1xf32>
    %cst_19 = arith.constant 3.906250e-03 : f32
    %58 = vector.broadcast %cst_19 : f32 to vector<1x1xf32>
    %59 = arith.mulf %57, %58 : vector<1x1xf32>
    %60 = arith.mulf %54, %54 : vector<1x1xf32>
    %61 = arith.subf %59, %60 : vector<1x1xf32>
    %62 = vector.broadcast %54 : vector<1x1xf32> to vector<1x256xf32>
    %63 = arith.subf %50, %62 : vector<1x256xf32>
    %cst_20 = arith.constant 9.99999974E-6 : f32
    %64 = vector.broadcast %cst_20 : f32 to vector<1x1xf32>
    %65 = arith.addf %61, %64 : vector<1x1xf32>
    %66 = math.rsqrt %65 : vector<1x1xf32>
    %67 = vector.broadcast %66 : vector<1x1xf32> to vector<1x256xf32>
    %68 = arith.mulf %63, %67 : vector<1x256xf32>
    %69 = vector.broadcast %3 : f32 to vector<1x256xf32>
    %70 = arith.mulf %68, %69 : vector<1x256xf32>
    %71 = vector.broadcast %4 : f32 to vector<1x256xf32>
    %72 = arith.addf %70, %71 : vector<1x256xf32>
    %73 = vector.broadcast %5 : f32 to vector<1x256xf32>
    %74 = arith.mulf %73, %72 : vector<1x256xf32>
    %75 = vector.broadcast %6 : f32 to vector<1x256xf32>
    %76 = arith.addf %74, %75 : vector<1x256xf32>
    %77 = vector.extract_strided_slice %1 {offsets = [2, 0], sizes = [1, 256], strides = [1, 1]} : vector<3x256xf32> to vector<1x256xf32>
    %cst_21 = arith.constant 0.000000e+00 : f32
    %78 = vector.broadcast %cst_21 : f32 to vector<1x256xf32>
    %79 = arith.cmpf oeq, %77, %78 : vector<1x256xf32>
    %cst_22 = arith.constant -1.000000e+09 : f32
    %80 = vector.broadcast %cst_22 : f32 to vector<1x256xf32>
    %81 = arith.select %79, %80, %76 : vector<1x256xi1>, vector<1x256xf32>
    %cst_23 = arith.constant dense<0xFF800000> : vector<1xf32>
    %82 = vector.multi_reduction <maximumf>, %72, %cst_23 [1] : vector<1x256xf32> to vector<1xf32>
    %83 = vector.shape_cast %82 : vector<1xf32> to vector<1x1xf32>
    %cst_24 = arith.constant dense<0xFF800000> : vector<1xf32>
    %84 = vector.multi_reduction <maximumf>, %81, %cst_24 [1] : vector<1x256xf32> to vector<1xf32>
    %85 = vector.shape_cast %84 : vector<1xf32> to vector<1x1xf32>
    %86 = vector.shape_cast %83 : vector<1x1xf32> to vector<1x1xf32>
    %87 = vector.broadcast %86 : vector<1x1xf32> to vector<1x128xf32>
    %c0_25 = arith.constant 0 : index
    %c0_26 = arith.constant 0 : index
    %c0_27 = arith.constant 0 : index
    %88 = vector.load %arg5[%c0_25, %c0_26, %c0_27] : memref<1x1x128xf32, #tpu.memory_space<vmem>>, vector<1x1x128xf32>
    %89 = vector.shape_cast %88 : vector<1x1x128xf32> to vector<1x128xf32>
    %90 = vector.shape_cast %87 : vector<1x128xf32> to vector<1x1x128xf32>
    tpu.vector_store %arg5[%c0_25, %c0_26, %c0_27], %90 {strides = array<i32>} : memref<1x1x128xf32, #tpu.memory_space<vmem>>, vector<1x1x128xf32>,
    %91 = vector.broadcast %85 : vector<1x1xf32> to vector<1x256xf32>
    %92 = arith.subf %81, %91 : vector<1x256xf32>
    %93 = math.exp %92 : vector<1x256xf32>
    %cst_28 = arith.constant dense<0.000000e+00> : vector<1xf32>
    %94 = vector.multi_reduction <add>, %93, %cst_28 [1] : vector<1x256xf32> to vector<1xf32>
    %95 = vector.shape_cast %94 : vector<1xf32> to vector<1x1xf32>
    %96 = tpu.reciprocal %95 : vector<1x1xf32> -> vector<1x1xf32>
    %97 = vector.broadcast %96 : vector<1x1xf32> to vector<1x256xf32>
    %98 = arith.mulf %93, %97 : vector<1x256xf32>
    %c0_29 = arith.constant 0 : index
    %c0_30 = arith.constant 0 : index
    %c0_31 = arith.constant 0 : index
    %99 = vector.load %arg4[%c0_29, %c0_30, %c0_31] : memref<1x1x256xf32, #tpu.memory_space<vmem>>, vector<1x1x256xf32>
    %100 = vector.shape_cast %99 : vector<1x1x256xf32> to vector<1x256xf32>
    %101 = vector.shape_cast %98 : vector<1x256xf32> to vector<1x1x256xf32>
    tpu.vector_store %arg4[%c0_29, %c0_30, %c0_31], %101 {strides = array<i32>} : memref<1x1x256xf32, #tpu.memory_space<vmem>>, vector<1x1x256xf32>,
    return
  }
  func.func @transform_0(%arg0: i32) -> (i32, i32, i32) {
    %c0_i32 = arith.constant 0 : i32
    %c0_i32_0 = arith.constant 0 : i32
    %c0_i32_1 = arith.constant 0 : i32
    return %arg0, %c0_i32, %c0_i32_0 : i32, i32, i32
  }
  func.func @transform_1(%arg0: i32) -> (i32, i32) {
    %c0_i32 = arith.constant 0 : i32
    %c0_i32_0 = arith.constant 0 : i32
    %c0_i32_1 = arith.constant 0 : i32
    return %c0_i32, %c0_i32_0 : i32, i32
  }
  func.func @transform_2(%arg0: i32) -> i32 {
    %c0_i32 = arith.constant 0 : i32
    %c0_i32_0 = arith.constant 0 : i32
    return %c0_i32 : i32
  }
  func.func @transform_3(%arg0: i32) -> (i32, i32, i32) {
    %c0_i32 = arith.constant 0 : i32
    %c0_i32_0 = arith.constant 0 : i32
    %c0_i32_1 = arith.constant 0 : i32
    return %arg0, %c0_i32, %c0_i32_0 : i32, i32, i32
  }
  func.func @transform_4(%arg0: i32) -> (i32, i32, i32) {
    %c0_i32 = arith.constant 0 : i32
    %c0_i32_0 = arith.constant 0 : i32
    %c0_i32_1 = arith.constant 0 : i32
    return %arg0, %c0_i32, %c0_i32_0 : i32, i32, i32
  }
}

</mosaic_0001>

<llo_original>
// kernel: a2c_actor_critic_forward.1
$region0: #{a2c_actor_critic_forward.1}
  #allocation0 [shape = 'u32[]', space=smem, size = 0x4, offset = 0x4, fixed_abs, tag = 'smem constant byte address 0x4 - core index']
  #allocation1 [shape = 'u32[144,128]{1,0:T(1,128)}', space=vmem, size = 0x12000, scoped, tag = 'internal scratch']
  %s0 = inlined_call_operand.vmem [shape: f32[8,3,256], index: 0, kind: input, shape index: {}]
  %s1 = inlined_call_operand.vmem [shape: f32[56,256], index: 1, kind: input, shape index: {}]
  %s2 = inlined_call_operand.vmem [shape: f32[5], index: 2, kind: input, shape index: {}]
  %s3 = inlined_call_operand.vmem [shape: f32[8,1,256], index: 3, kind: output, shape index: {0}]
  %s4 = inlined_call_operand.vmem [shape: f32[8,1,128], index: 4, kind: output, shape index: {1}]
  %5 = xla_tuple %s3, %s4
  %s6 = sld [smem:[#allocation0]]
  $region57: #{a2c_actor_critic_forward.1} parent=0
    _
  %s8 = ssub.s32 1, %s6
  %s9 = scalar_select 0, %s8, %s6
  $region1: #{a2c_actor_critic_forward.1} parent=0
    #allocation2 [shape = 'u8[512]{0}', space=smem, size = 0x200, scoped, tag = 'input window, operand 2, single buffered']
    #allocation3 [shape = 's32[2]{0}', space=sflag, size = 0x8, scoped, tag = 'scoped memory for a2c_actor_critic_forward.1']
    %10 = vsyncpa [#allocation3], 0
    loop: start=0, step=1, limit=10
    $region2: #{a2c_actor_critic_forward.1} parent=1 // loop_pre_header
      _
    $region3: #{a2c_actor_critic_forward.1} parent=1 // loop_header
      %s12 = sphi 0, %s16
      %p13 = scmp.ge.s32.totalorder %s12, 10
      %s22 = sphi 0, %s24
      %s25 = sphi 0, %s22
      %s26 = sphi 0, %s25
      %s42 = sphi 0, %s26
      %s46 = sphi 0, %s46
      %s48 = sphi 0, %s46
      %s49 = sphi 0, %s48
      %s63 = sphi 0, %s49
      %s67 = sphi 0, %s67
      %s69 = sphi 0, %s67
      %s70 = sphi 0, %s69
      %s84 = sphi 0, %s70
      %s90 = sphi 0, %s92
      %s93 = sphi 0, %s90
      %s94 = sphi 0, %s93
      %s110 = sphi 0, %s94
      %s116 = sphi 0, %s118
      %s119 = sphi 0, %s116
      %s120 = sphi 0, %s119
      %s136 = sphi 0, %s120
    $region4: #{a2c_actor_critic_forward.1} parent=1 // loop_header_branch
      %15 = sbr.rel (%p13) target = $region8
    $region5: #{a2c_actor_critic_forward.1} parent=1 // loop_body
      %s17 = ssub.s32 %s12, 1
      %s18 = ssub.s32 %s12, 2
      %s19 = sadd.s32 %s12, 1
      %s20 = ssub.s32 %s12, %s19
      %p21 = scmp.eq.s32.totalorder %s20, 0
      %s23 = sadd.s32 %s22, 1
      %s24 = scalar_select %p21, %s22, %s23
      %p27 = pneg %p21
      %p28 = scmp.eq.s32.totalorder %s12, 7
      %p29 = por %p27, %p28
      %p30 = scmp.ne.s32.totalorder %s22, %s25
      %p31 = scmp.eq.s32.totalorder %s12, 0
      %p32 = por %p30, %p31
      %p33 = scmp.ne.s32.totalorder %s22, %s25
      %p34 = scmp.eq.s32.totalorder %s17, 7
      %p35 = por %p33, %p34
      %p36 = scmp.ne.s32.totalorder %s25, %s26
      %p37 = scmp.eq.s32.totalorder %s17, 0
      %p38 = por %p36, %p37
      %p39 = scmp.ne.s32.totalorder %s25, %s26
      %p40 = scmp.eq.s32.totalorder %s18, 7
      %p41 = por %p39, %p40
      %p43 = scmp.ne.s32.totalorder %s26, %s42
      %p44 = scmp.eq.s32.totalorder %s18, 0
      %p45 = por %p43, %p44
      %s47 = sadd.s32 %s46, 1
      %p50 = scmp.eq.s32.totalorder %s12, 7
      %p51 = scmp.ne.s32.totalorder %s46, %s48
      %p52 = scmp.eq.s32.totalorder %s12, 0
      %p53 = por %p51, %p52
      %p54 = scmp.ne.s32.totalorder %s46, %s48
      %p55 = scmp.eq.s32.totalorder %s17, 7
      %p56 = por %p54, %p55
      %p57 = scmp.ne.s32.totalorder %s48, %s49
      %p58 = scmp.eq.s32.totalorder %s17, 0
      %p59 = por %p57, %p58
      %p60 = scmp.ne.s32.totalorder %s48, %s49
      %p61 = scmp.eq.s32.totalorder %s18, 7
      %p62 = por %p60, %p61
      %p64 = scmp.ne.s32.totalorder %s49, %s63
      %p65 = scmp.eq.s32.totalorder %s18, 0
      %p66 = por %p64, %p65
      %s68 = sadd.s32 %s67, 1
      %p71 = scmp.eq.s32.totalorder %s12, 7
      %p72 = scmp.ne.s32.totalorder %s67, %s69
      %p73 = scmp.eq.s32.totalorder %s12, 0
      %p74 = por %p72, %p73
      %p75 = scmp.ne.s32.totalorder %s67, %s69
      %p76 = scmp.eq.s32.totalorder %s17, 7
      %p77 = por %p75, %p76
      %p78 = scmp.ne.s32.totalorder %s69, %s70
      %p79 = scmp.eq.s32.totalorder %s17, 0
      %p80 = por %p78, %p79
      %p81 = scmp.ne.s32.totalorder %s69, %s70
      %p82 = scmp.eq.s32.totalorder %s18, 7
      %p83 = por %p81, %p82
      %p85 = scmp.ne.s32.totalorder %s70, %s84
      %p86 = scmp.eq.s32.totalorder %s18, 0
      %p87 = por %p85, %p86
      %s88 = ssub.s32 %s12, %s19
      %p89 = scmp.eq.s32.totalorder %s88, 0
      %s91 = sadd.s32 %s90, 1
      %s92 = scalar_select %p89, %s90, %s91
      %p95 = pneg %p89
      %p96 = scmp.eq.s32.totalorder %s12, 7
      %p97 = por %p95, %p96
      %p98 = scmp.ne.s32.totalorder %s90, %s93
      %p99 = scmp.eq.s32.totalorder %s12, 0
      %p100 = por %p98, %p99
      %p101 = scmp.ne.s32.totalorder %s90, %s93
      %p102 = scmp.eq.s32.totalorder %s17, 7
      %p103 = por %p101, %p102
      %p104 = scmp.ne.s32.totalorder %s93, %s94
      %p105 = scmp.eq.s32.totalorder %s17, 0
      %p106 = por %p104, %p105
      %p107 = scmp.ne.s32.totalorder %s93, %s94
      %p108 = scmp.eq.s32.totalorder %s18, 7
      %p109 = por %p107, %p108
      %p111 = scmp.ne.s32.totalorder %s94, %s110
      %p112 = scmp.eq.s32.totalorder %s18, 0
      %p113 = por %p111, %p112
      %s114 = ssub.s32 %s12, %s19
      %p115 = scmp.eq.s32.totalorder %s114, 0
      %s117 = sadd.s32 %s116, 1
      %s118 = scalar_select %p115, %s116, %s117
      %p121 = pneg %p115
      %p122 = scmp.eq.s32.totalorder %s12, 7
      %p123 = por %p121, %p122
      %p124 = scmp.ne.s32.totalorder %s116, %s119
      %p125 = scmp.eq.s32.totalorder %s12, 0
      %p126 = por %p124, %p125
      %p127 = scmp.ne.s32.totalorder %s116, %s119
      %p128 = scmp.eq.s32.totalorder %s17, 7
      %p129 = por %p127, %p128
      %p130 = scmp.ne.s32.totalorder %s119, %s120
      %p131 = scmp.eq.s32.totalorder %s17, 0
      %p132 = por %p130, %p131
      %p133 = scmp.ne.s32.totalorder %s119, %s120
      %p134 = scmp.eq.s32.totalorder %s18, 7
      %p135 = por %p133, %p134
      %p137 = scmp.ne.s32.totalorder %s120, %s136
      %p138 = scmp.eq.s32.totalorder %s18, 0
      %p139 = por %p137, %p138
      %p140 = scmp.le.s32.totalorder 1, %s12
      %p141 = scmp.lt.s32.totalorder %s12, 9
      %p142 = pnand %p140, %p141
      %p143 = pneg %p142
      // Predicated region
      $region9: #{a2c_actor_critic_forward.1} parent=5 // pred_check
        _
      $region10: #{a2c_actor_critic_forward.1} parent=5 // pred_check_branch
        %145 = sbr.rel (%p142) target = $region12
      $region11: #{a2c_actor_critic_forward.1} parent=5 // pred_region
        %s146 = ssub.s32 %s12, 1
        // Predicated region
        $region13: #{a2c_actor_critic_forward.1} parent=11 // pred_check
          %p147 = pneg %p59
        $region14: #{a2c_actor_critic_forward.1} parent=11 // pred_check_branch
          %149 = sbr.rel (%p147) target = $region16
        $region15: #{a2c_actor_critic_forward.1} parent=11 // pred_region
          _
        $region16: #{a2c_actor_critic_forward.1} parent=11 // pred_fallthru
          _
        // Predicated region
        $region17: #{a2c_actor_critic_forward.1} parent=11 // pred_check
          %p150 = pneg %p80
        $region18: #{a2c_actor_critic_forward.1} parent=11 // pred_check_branch
          %152 = sbr.rel (%p150) target = $region20
        $region19: #{a2c_actor_critic_forward.1} parent=11 // pred_region
          %s154 = ssub.s32 16, 16
          %155 = vsyncadd [#allocation3], %s154
          %s157 = sshll.u32 %s2, 4
          %s158 = int_to_ptr.vmem [resolvable:$true] %s157
          %160 = dma.vmem_to_smem %s158, 16, [#allocation2], [#allocation3]
        $region20: #{a2c_actor_critic_forward.1} parent=11 // pred_fallthru
          _
      $region12: #{a2c_actor_critic_forward.1} parent=5 // pred_fallthru
        _
      %p161 = scmp.lt.s32.totalorder %s12, 8
      // Predicated region
      $region21: #{a2c_actor_critic_forward.1} parent=5 // pred_check
        %p162 = pneg %p161
      $region22: #{a2c_actor_critic_forward.1} parent=5 // pred_check_branch
        %164 = sbr.rel (%p162) target = $region24
      $region23: #{a2c_actor_critic_forward.1} parent=5 // pred_region
        // Predicated region
        $region25: #{a2c_actor_critic_forward.1} parent=23 // pred_check
          %p165 = pneg %p32
        $region26: #{a2c_actor_critic_forward.1} parent=23 // pred_check_branch
          %167 = sbr.rel (%p165) target = $region28
        $region27: #{a2c_actor_critic_forward.1} parent=23 // pred_region
          %p168 = scmp.lt.s32.totalorder %s12, 7
          %s169 = scalar_select %p168, %s12, 7
          %s170 = smul.addr %s169, 2
          %s171 = smul.addr %s170, 4
          %s172 = scalar_lea.vmem %s0, %s171
        $region28: #{a2c_actor_critic_forward.1} parent=23 // pred_fallthru
          _
      $region24: #{a2c_actor_critic_forward.1} parent=5 // pred_fallthru
        _
      %p173 = scmp.le.s32.totalorder 1, %s12
      %p174 = scmp.lt.s32.totalorder %s12, 9
      %p175 = pnand %p173, %p174
      %p176 = pneg %p175
      // Predicated region
      $region29: #{a2c_actor_critic_forward.1} parent=5 // pred_check
        _
      $region30: #{a2c_actor_critic_forward.1} parent=5 // pred_check_branch
        %178 = sbr.rel (%p175) target = $region32
      $region31: #{a2c_actor_critic_forward.1} parent=5 // pred_region
        %s179 = ssub.s32 %s12, 1
        // Predicated region
        $region33: #{a2c_actor_critic_forward.1} parent=31 // pred_check
          %p180 = pneg %p80
        $region34: #{a2c_actor_critic_forward.1} parent=31 // pred_check_branch
          %182 = sbr.rel (%p180) target = $region36
        $region35: #{a2c_actor_critic_forward.1} parent=31 // pred_region
          %183 = dma.done [#allocation3], 16
        $region36: #{a2c_actor_critic_forward.1} parent=31 // pred_fallthru
          _
        %184 = sfence
        %p185 = scmp.lt.s32.totalorder %s17, 7
        %s186 = scalar_select %p185, %s17, 7
        %s187 = smul.addr %s186, 2
        %s188 = smul.addr %s187, 4
        %s189 = scalar_lea.vmem %s0, %s188
        %p190 = pneg %p38
        %p191 = pneg %p35
        %p192 = pneg %p59
        %p193 = pneg %p56
        %p194 = pneg %p80
        %p195 = pneg %p77
        %p196 = pneg %p106
        %p197 = pneg %p103
        %p198 = scmp.lt.s32.totalorder %s17, 7
        %s199 = scalar_select %p198, %s17, 7
        %s200 = smul.addr %s199, 2
        %s201 = scalar_lea.vmem %s3, %s200
        %p202 = pneg %p132
        %p203 = pneg %p129
        %p204 = scmp.lt.s32.totalorder %s17, 7
        %s205 = scalar_select %p204, %s17, 7
        %s206 = scalar_lea.vmem %s4, %s205
        %p207 = scmp.lt.s32.totalorder %s17, 7
        %s208 = scalar_select %p207, %s17, 7
        %s209 = smul.addr %s208, 2
        %s210 = smul.addr %s209, 4
        %s211 = scalar_lea.vmem %s0, %s210
        %p212 = scmp.lt.s32.totalorder %s17, 7
        %s213 = scalar_select %p212, %s17, 7
        %s214 = smul.addr %s213, 2
        %s215 = scalar_lea.vmem %s3, %s214
        %p216 = scmp.lt.s32.totalorder %s17, 7
        %s217 = scalar_select %p216, %s17, 7
        %s218 = scalar_lea.vmem %s4, %s217
        %v219 = vld [vmem:[%s211] sm:$0x77]
        %s220 = sld [smem:[#allocation2]]
        %s221 = sld [smem:[#allocation2 + $0x1]]
        %s222 = sld [smem:[#allocation2 + $0x2]]
        %s223 = sld [smem:[#allocation2 + $0x3]]
        %s224 = sld [smem:[#allocation2 + $0x4]]
        %v225 = vld [vmem:[%s1] sm:$0xff]
        %v226 = vld [vmem:[%s1 + $0x8] sm:$0xff]
        %v228 = vlaneseq
        %v229 = vshrl.u32 %v228, 7
        %v230 = vsub.s32 0, %v229
        %v231 = vrot.slane %v219, %v230
        %v232 = vlaneseq
        %v233 = vshrl.u32 %v232, 7
        %v234 = vsub.s32 4, %v233
        %v235 = vrot.slane %v219, %v234
        %v238 = vlaneseq
        %v239 = vshrl.u32 %v238, 7
        %v240 = vsub.s32 0, %v239
        %v241 = vrot.slane %v231, %v240
        %v242 = vlaneseq
        %v243 = vshrl.u32 %v242, 7
        %v244 = vsub.s32 0, %v243
        %v245 = vrot.slane %v235, %v244
        %v246 = vmul.f32 %v225, %v241
        %v247 = vmul.f32 %v226, %v245
        %v248 = vld [vmem:[%s1 + $0x10] sm:$0xff]
        %v249 = vld [vmem:[%s1 + $0x18] sm:$0xff]
        %v250 = vlaneseq
        %v251 = vshrl.u32 %v250, 7
        %v252 = vsub.s32 1, %v251
        %v253 = vrot.slane %v219, %v252
        %v254 = vlaneseq
        %v255 = vshrl.u32 %v254, 7
        %v256 = vsub.s32 5, %v255
        %v257 = vrot.slane %v219, %v256
        %v260 = vlaneseq
        %v261 = vshrl.u32 %v260, 7
        %v262 = vsub.s32 1, %v261
        %v263 = vrot.slane %v253, %v262
        %v264 = vlaneseq
        %v265 = vshrl.u32 %v264, 7
        %v266 = vsub.s32 1, %v265
        %v267 = vrot.slane %v257, %v266
        %v268 = vmul.f32 %v248, %v263
        %v269 = vmul.f32 %v249, %v267
        %v270 = vadd.f32 %v246, %v268
        %v271 = vadd.f32 %v247, %v269
        %v272 = vld [vmem:[%s1 + $0x20] sm:$0xff]
        %v273 = vld [vmem:[%s1 + $0x28] sm:$0xff]
        %v274 = vlaneseq
        %v275 = vshrl.u32 %v274, 7
        %v276 = vsub.s32 2, %v275
        %v277 = vrot.slane %v219, %v276
        %v278 = vlaneseq
        %v279 = vshrl.u32 %v278, 7
        %v280 = vsub.s32 6, %v279
        %v281 = vrot.slane %v219, %v280
        %v284 = vlaneseq
        %v285 = vshrl.u32 %v284, 7
        %v286 = vsub.s32 2, %v285
        %v287 = vrot.slane %v277, %v286
        %v288 = vlaneseq
        %v289 = vshrl.u32 %v288, 7
        %v290 = vsub.s32 2, %v289
        %v291 = vrot.slane %v281, %v290
        %v292 = vmul.f32 %v272, %v287
        %v293 = vmul.f32 %v273, %v291
        %v294 = vadd.f32 %v270, %v292
        %v295 = vadd.f32 %v271, %v293
        %v296 = vld [vmem:[%s1 + $0x30] sm:$0xff]
        %v297 = vld [vmem:[%s1 + $0x38] sm:$0xff]
        %v298 = vadd.f32 %v294, %v296
        %v299 = vadd.f32 %v295, %v297
        %v300 = vadd.f32 %v298, %v299
        %301 = vadd.xlane.f32.xlu0 %v300
        %v302 = vpop.xlane.xlu0 %301
        %v303 = vmul.f32 %v302, 0.00390625
        %v304 = vmul.f32 %v298, %v298
        %v305 = vmul.f32 %v299, %v299
        %v306 = vadd.f32 %v304, %v305
        %307 = vadd.xlane.f32.xlu0 %v306
        %v308 = vpop.xlane.xlu0 %307
        %v309 = vmul.f32 %v308, 0.00390625
        %v310 = vmul.f32 %v303, %v303
        %v311 = vsub.f32 %v309, %v310
        %v312 = vsub.f32 %v298, %v303
        %v313 = vsub.f32 %v299, %v303
        %v314 = vadd.f32 %v311, 1e-05
        %v315 = vrsqrt.pop %v314
        %v316 = vmul.f32 %v312, %v315
        %v317 = vmul.f32 %v313, %v315
        %v318 = vld [vmem:[%s1 + $0x40] sm:$0xff]
        %v319 = vld [vmem:[%s1 + $0x48] sm:$0xff]
        %v320 = vmul.f32 %v316, %v318
        %v321 = vmul.f32 %v317, %v319
        %v322 = vld [vmem:[%s1 + $0x50] sm:$0xff]
        %v323 = vld [vmem:[%s1 + $0x58] sm:$0xff]
        %v324 = vadd.f32 %v320, %v322
        %v325 = vadd.f32 %v321, %v323
        %v326 = vld [vmem:[%s1 + $0x60] sm:$0xff]
        %v327 = vld [vmem:[%s1 + $0x68] sm:$0xff]
        %v328 = vmul.f32 %v324, %v326
        %v329 = vmul.f32 %v325, %v327
        %v330 = vrot.slane %v328, 4
        %v331 = vadd.f32 %v328, %v330
        %v332 = vrot.slane %v331, 2
        %v333 = vadd.f32 %v331, %v332
        %v334 = vrot.slane %v333, 1
        %v335 = vadd.f32 %v333, %v334
        %v336 = vrot.slane %v329, 4
        %v337 = vadd.f32 %v329, %v336
        %v338 = vrot.slane %v337, 2
        %v339 = vadd.f32 %v337, %v338
        %v340 = vrot.slane %v339, 1
        %v341 = vadd.f32 %v339, %v340
        %v342 = vstv %s220
        %v343 = vadd.f32 %v335, %v342
        %v344 = vadd.f32 %v341, %v342
        %v345 = vadd.f32 %v343, %v344
        %346 = vadd.xlane.f32.xlu0 %v345
        %v347 = vpop.xlane.xlu0 %346
        %v348 = vmul.f32 %v347, 0.00390625
        %v349 = vmul.f32 %v343, %v343
        %v350 = vmul.f32 %v344, %v344
        %v351 = vadd.f32 %v349, %v350
        %352 = vadd.xlane.f32.xlu0 %v351
        %v353 = vpop.xlane.xlu0 %352
        %v354 = vmul.f32 %v353, 0.00390625
        %v355 = vmul.f32 %v348, %v348
        %v356 = vsub.f32 %v354, %v355
        %v357 = vsub.f32 %v343, %v348
        %v358 = vsub.f32 %v344, %v348
        %v359 = vadd.f32 %v356, 1e-05
        %v360 = vrsqrt.pop %v359
        %v361 = vmul.f32 %v357, %v360
        %v362 = vmul.f32 %v358, %v360
        %v363 = vstv %s221
        %v364 = vmul.f32 %v361, %v363
        %v365 = vmul.f32 %v362, %v363
        %v366 = vstv %s222
        %v367 = vadd.f32 %v364, %v366
        %v368 = vadd.f32 %v365, %v366
        %v369 = vstv %s223
        %v370 = vmul.f32 %v369, %v367
        %v371 = vmul.f32 %v369, %v368
        %v372 = vstv %s224
        %v373 = vadd.f32 %v370, %v372
        %v374 = vadd.f32 %v371, %v372
        %vm375 = vcmp.eq.f32.partialorder %v219, 0.0
        %v378 = vcombine.low %v373, %v374
        %v379 = vrot.slane %v378, 6
        %v381 = vsel %vm375, -1e+09, %v379
        %v382 = vmax.f32 %v367, %v368
        %383 = vmax.xlane.f32.xlu0 %v382
        %v384 = vpop.xlane.xlu0 %383
        %v386 = vlaneseq
        %v387 = vshrl.u32 %v386, 7
        %v388 = vsub.s32 2, %v387
        %v389 = vrot.slane %v381, %v388
        %v390 = vlaneseq
        %v391 = vshrl.u32 %v390, 7
        %v392 = vsub.s32 6, %v391
        %v393 = vrot.slane %v381, %v392
        %vm396 = vcmask 1042434
        %v397 = vsel %vm396, %v389, -inf
        %v398 = vsel %vm396, %v393, -inf
        %v399 = vmax.f32 %v397, %v398
        %400 = vmax.xlane.f32.xlu0 %v399
        %v401 = vpop.xlane.xlu0 %400
        %402 = vst [vmem:[%s218] sm:$0x1] %v384
        %v405 = vunpack.c.l.s4 839922192
        %v406 = vunpack.c.0.s8 %v405
        %v407 = vlaneseq
        %v408 = vshrl.u32 %v407, 7
        %v409 = vsub.s32 %v406, %v408
        %v410 = vrot.slane %v401, %v409
        %v412 = vsub.f32 %v381, %v410
        %v413 = vmul.f32 %v412, 1.442695
        %v414 = vpow.pop %v413
        %v416 = vlaneseq
        %v417 = vshrl.u32 %v416, 7
        %v418 = vsub.s32 2, %v417
        %v419 = vrot.slane %v414, %v418
        %v420 = vlaneseq
        %v421 = vshrl.u32 %v420, 7
        %v422 = vsub.s32 6, %v421
        %v423 = vrot.slane %v414, %v422
        %v426 = vsel %vm396, %v419, 0.0
        %v427 = vsel %vm396, %v423, 0.0
        %v428 = vadd.f32 %v426, %v427
        %429 = vadd.xlane.f32.xlu0 %v428
        %v430 = vpop.xlane.xlu0 %429
        %v431 = vrcp.pop %v430
        %v434 = vunpack.c.l.s4 839922192
        %v435 = vunpack.c.0.s8 %v434
        %v436 = vlaneseq
        %v437 = vshrl.u32 %v436, 7
        %v438 = vsub.s32 %v435, %v437
        %v439 = vrot.slane %v431, %v438
        %v441 = vmul.f32 %v414, %v439
        %v444 = vunpack.c.l.s4 1966171168
        %v445 = vunpack.c.0.s8 %v444
        %v446 = vlaneseq
        %v447 = vshrl.u32 %v446, 7
        %v448 = vsub.s32 %v445, %v447
        %v449 = vrot.slane %v441, %v448
        %v451 = vunpack.c.l.s4 1966171168
        %v452 = vunpack.c.0.s8 %v451
        %v453 = vlaneseq
        %v454 = vshrl.u32 %v453, 7
        %v455 = vsub.s32 %v452, %v454
        %v456 = vrot.slane %v449, %v455
        %v457 = vcombine.high %v456, %v456
        %v459 = vlaneseq
        %vm460 = vcmp.ge.s32.totalorder %v459, 0
        %vm461 = vcmp.lt.s32.totalorder %v459, 256
        %vm462 = vmand %vm460, %vm461
        %463 = vst.msk [vmem:[%s215] sm:$0x3] %vm462, %v457
        %p464 = scmp.lt.s32.totalorder %s17, 7
        %s465 = scalar_select %p464, %s17, 7
        %s466 = smul.addr %s465, 2
        %s467 = scalar_lea.vmem %s3, %s466
        %p468 = scmp.lt.s32.totalorder %s17, 7
        %s469 = scalar_select %p468, %s17, 7
        %s470 = scalar_lea.vmem %s4, %s469
        // Predicated region
        $region37: #{a2c_actor_critic_forward.1} parent=31 // pred_check
          %p471 = pneg %p103
        $region38: #{a2c_actor_critic_forward.1} parent=31 // pred_check_branch
          %473 = sbr.rel (%p471) target = $region40
        $region39: #{a2c_actor_critic_forward.1} parent=31 // pred_region
          _
        $region40: #{a2c_actor_critic_forward.1} parent=31 // pred_fallthru
          _
        // Predicated region
        $region41: #{a2c_actor_critic_forward.1} parent=31 // pred_check
          %p474 = pneg %p129
        $region42: #{a2c_actor_critic_forward.1} parent=31 // pred_check_branch
          %476 = sbr.rel (%p474) target = $region44
        $region43: #{a2c_actor_critic_forward.1} parent=31 // pred_region
          _
        $region44: #{a2c_actor_critic_forward.1} parent=31 // pred_fallthru
          _
      $region32: #{a2c_actor_critic_forward.1} parent=5 // pred_fallthru
        _
      %p477 = scmp.le.s32.totalorder 2, %s12
      // Predicated region
      $region45: #{a2c_actor_critic_forward.1} parent=5 // pred_check
        %p478 = pneg %p477
      $region46: #{a2c_actor_critic_forward.1} parent=5 // pred_check_branch
        %480 = sbr.rel (%p478) target = $region48
      $region47: #{a2c_actor_critic_forward.1} parent=5 // pred_region
        %s481 = ssub.s32 %s12, 2
        // Predicated region
        $region49: #{a2c_actor_critic_forward.1} parent=47 // pred_check
          %p482 = pneg %p109
        $region50: #{a2c_actor_critic_forward.1} parent=47 // pred_check_branch
          %484 = sbr.rel (%p482) target = $region52
        $region51: #{a2c_actor_critic_forward.1} parent=47 // pred_region
          %p485 = scmp.lt.s32.totalorder %s18, 7
          %s486 = scalar_select %p485, %s18, 7
          %s487 = smul.addr %s486, 2
          %s488 = scalar_lea.vmem %s3, %s487
        $region52: #{a2c_actor_critic_forward.1} parent=47 // pred_fallthru
          _
        // Predicated region
        $region53: #{a2c_actor_critic_forward.1} parent=47 // pred_check
          %p489 = pneg %p135
        $region54: #{a2c_actor_critic_forward.1} parent=47 // pred_check_branch
          %491 = sbr.rel (%p489) target = $region56
        $region55: #{a2c_actor_critic_forward.1} parent=47 // pred_region
          %p492 = scmp.lt.s32.totalorder %s18, 7
          %s493 = scalar_select %p492, %s18, 7
          %s494 = scalar_lea.vmem %s4, %s493
        $region56: #{a2c_actor_critic_forward.1} parent=47 // pred_fallthru
          _
      $region48: #{a2c_actor_critic_forward.1} parent=5 // pred_fallthru
        _
    $region6: #{a2c_actor_critic_forward.1} parent=1 // loop_footer
      %s16 = sadd.s32 1, %s12
    $region7: #{a2c_actor_critic_forward.1} parent=1 // loop_footer_branch
      %11 = sbr.rel target = $region3
    $region8: #{a2c_actor_critic_forward.1} parent=1 // loop_exit
      _
    %495 = vsyncpa [#allocation3], 1
    %s496 = scalar_lea.sflag [#allocation3], 1
    %497 = vsyncpa %s496, 1

</llo_original>
